<compile_context>
chip_gen: v7x
topology: tpu7x:2x2x1
jax: 0.10.0
libtpu: 0.0.40
codegen_flags: <defaults>
</compile_context>

<pallas_src>
import math

import jax
import jax.numpy as jnp
from jax.experimental import pallas as pl
from jax.experimental.pallas import tpu as pltpu


# --------------------------------------------------------------------------
# Buffer construction (glue, mirrors nn.Module.__init__ exactly)
# --------------------------------------------------------------------------
def make_positional_encodings(input_shape, size=None, max_spatial_lens=None,
                              channels_first=True):
    if isinstance(input_shape, int):
        input_shape = (input_shape,)
    if max_spatial_lens is None:
        max_spatial_lens = (input_shape[-1:None:-1][:-1] if channels_first
                            else input_shape[:-1])
    input_dim = input_shape[0] if channels_first else input_shape[-1]
    size = max(size or input_dim, len(max_spatial_lens) * 2)

    n = len(max_spatial_lens)
    div_term = jnp.exp(jnp.arange(0, size, 2 * n, dtype=jnp.float32)
                       * (-math.log(10000.0) / size))
    grids = jnp.meshgrid(*[jnp.arange(l) for l in max_spatial_lens],
                         indexing='ij')
    positions = jnp.stack(grids, -1).astype(jnp.float32)          # (*lens, n)
    positions = (positions[..., :, None] * div_term[None, :]) \
        .reshape(*max_spatial_lens, -1)

    pe = jnp.zeros((*max_spatial_lens, size), jnp.float32)
    pe = pe.at[..., 0::2].set(jnp.sin(positions))
    end = -(size % 2) or None
    pe = pe.at[..., 1::2].set(jnp.cos(positions[..., :end]))
    return pe, input_dim, size


# --------------------------------------------------------------------------
# One-time PE preprocessing (hoisted out of the per-call hot path):
# slice to the input spatial extents, permute to NCHW layout, cast to the
# input dtype, and flatten to a lane-dense (S_pad, 128) view (zero-padded to
# a lane multiple so the additive path is ALWAYS lane-dense).
# --------------------------------------------------------------------------
def prepare_pe(pe, spatial, dtype, lane=128):
    """spatial: the NCHW spatial shape of the input, e.g. (H, W)."""
    k = len(spatial)
    # PE is indexed by the ChSwap'd spatial axes: (d_k, d_1, ..., d_{k-1})
    slice_sizes = (spatial[-1], *spatial[:-1])
    pe_sl = pe[tuple(slice(0, s) for s in slice_sizes)]
    perm = (k,) + tuple(range(1, k)) + (0,)                      # -> (C, *spatial)
    pe_nchw = jnp.transpose(pe_sl, perm).astype(dtype)
    n = pe_nchw.size
    s_pad = -(-n // lane)
    flat = pe_nchw.reshape(-1)
    if s_pad * lane != n:
        flat = jnp.pad(flat, (0, s_pad * lane - n))
    pe_flat = flat.reshape(s_pad, lane)
    return pe_nchw, pe_flat, n


# --------------------------------------------------------------------------
# Kernels (pure VPU / store work; mem-bound)
# --------------------------------------------------------------------------
def _add_kernel(x_ref, pe_ref, o_ref):
    o_ref[...] = (x_ref[...] + pe_ref[...]).astype(o_ref.dtype)


def _concat_kernel(x_ref, pe_ref, o_ref):
    c = x_ref.shape[0]
    o_ref[:c] = x_ref[...].astype(o_ref.dtype)
    o_ref[c:] = pe_ref[...].astype(o_ref.dtype)


# --------------------------------------------------------------------------
# Tiling helpers
# --------------------------------------------------------------------------
def _sublane_align(itemsize):
    return {4: 8, 2: 16, 1: 32}.get(itemsize, 8)


def _row_tile(S, B, itemsize, lane=128, target_bytes=2 << 20):
    """Row-tile for a lane-dense (S, 128) stream.

    ~2 MiB per buffer (3 streams x 2 buffers = 12 MiB, fits v5e's 16 MiB
    scoped default); also capped so the parallel grid has >= ~4 units of work
    when B is small (keeps both v7x TensorCores busy)."""
    align = _sublane_align(itemsize)
    if S <= align:
        return S                          # block == full dim -> (8,128) waived
    cap = max(align, (target_bytes // (lane * itemsize)) // align * align)
    min_tiles = max(1, -(-4 // max(B, 1)))
    want = -(-S // min_tiles)
    want = max(align, -(-want // align) * align)
    return int(min(S, cap, want))


def _add_lane_dense(xv, pe_flat, lane=128):
    """xv: (B, S, 128), pe_flat: (S, 128). Grid (tiles, B), B innermost so the
    PE block index is constant across consecutive steps (no re-DMA per batch)."""
    B, S, _ = xv.shape
    ts = _row_tile(S, B, xv.dtype.itemsize, lane)
    return pl.pallas_call(
        _add_kernel,
        out_shape=jax.ShapeDtypeStruct(xv.shape, xv.dtype),
        grid=(pl.cdiv(S, ts), B),
        in_specs=[
            pl.BlockSpec((None, ts, lane), lambda t, b: (b, t, 0)),
            pl.BlockSpec((ts, lane), lambda t, b: (t, 0)),       # B-independent
        ],
        out_specs=pl.BlockSpec((None, ts, lane), lambda t, b: (b, t, 0)),
        compiler_params=pltpu.CompilerParams(
            dimension_semantics=("parallel", "parallel")),
    )(xv, pe_flat)


# --------------------------------------------------------------------------
# Forward (channels-first input, NCHW-like (B, C, *spatial))
# --------------------------------------------------------------------------
def positional_encodings_forward(x, pe_prepared, input_dim, size, *, lane=128):
    pe_nchw, pe_flat, n = pe_prepared
    B = x.shape[0]
    spatial = x.shape[2:]

    if input_dim == size:
        # ---------- additive path (dropout = identity in eval mode) ----------
        s_pad = pe_flat.shape[0]
        if n % lane == 0:
            xv = x.reshape(B, n // lane, lane)                   # metadata reshape
            return _add_lane_dense(xv, pe_flat, lane).reshape(x.shape)
        # Rare: C*prod(spatial) not 128-aligned -> pad once, stay lane-dense.
        xf = x.reshape(B, n)
        xp = jnp.pad(xf, ((0, 0), (0, s_pad * lane - n))).reshape(B, s_pad, lane)
        out = _add_lane_dense(xp, pe_flat, lane)
        return out.reshape(B, s_pad * lane)[:, :n].reshape(x.shape)

    # ---------- concatenation path (size != input_dim), fused single pass ----
    C = input_dim
    Ct = C + size
    HW = math.prod(spatial)
    out_shape_full = (B, Ct, *spatial)

    if HW % lane == 0:
        # Lane-dense tiled view: (..., HW/128, 128); channel axis stays out of
        # the last-two dims so the in-kernel channel split needs no sublane shifts.
        HWr = HW // lane
        itemsize = x.dtype.itemsize
        align = _sublane_align(itemsize)
        budget_rows = max(1, (1 << 20) // (Ct * lane * itemsize))
        if HWr <= align or budget_rows >= HWr:
            trow = HWr                                           # full dim -> waived
        else:
            trow = max(align, (min(budget_rows, HWr) // align) * align)

        xv = x.reshape(B, C, HWr, lane)
        pev = pe_nchw.reshape(size, HWr, lane)
        out = pl.pallas_call(
            _concat_kernel,
            out_shape=jax.ShapeDtypeStruct((B, Ct, HWr, lane), x.dtype),
            grid=(pl.cdiv(HWr, trow), B),                        # B innermost: PE resident
            in_specs=[
                pl.BlockSpec((None, C, trow, lane), lambda t, b: (b, 0, t, 0)),
                pl.BlockSpec((size, trow, lane), lambda t, b: (0, t, 0)),
            ],
            out_specs=pl.BlockSpec((None, Ct, trow, lane),
                                   lambda t, b: (b, 0, t, 0)),
            compiler_params=pltpu.CompilerParams(
                dimension_semantics=("parallel", "parallel")),
        )(xv, pev)
        return out.reshape(out_shape_full)

    # Fallback: prod(spatial) not 128-aligned -> full per-batch NCHW block
    # (block == full array dims, so the (8,128) rule is waived).
    # TODO(synk): pad prod(spatial) to a lane multiple to stay lane-dense here too.
    nd = x.ndim - 1
    return pl.pallas_call(
        _concat_kernel,
        out_shape=jax.ShapeDtypeStruct(out_shape_full, x.dtype),
        grid=(B,),
        in_specs=[
            pl.BlockSpec((None, *x.shape[1:]), lambda b: (b,) + (0,) * nd),
            pl.BlockSpec(pe_nchw.shape, lambda b: (0,) * pe_nchw.ndim),
        ],
        out_specs=pl.BlockSpec((None, *out_shape_full[1:]),
                               lambda b: (b,) + (0,) * nd),
        compiler_params=pltpu.CompilerParams(
            dimension_semantics=("parallel",)),
    )(x, pe_nchw)


# --------------------------------------------------------------------------
# Demo / correctness check
# --------------------------------------------------------------------------
if __name__ == "__main__":
    key = jax.random.PRNGKey(0)

    # --- additive path, lane-dense (C*H*W = 1792 = 14*128) -------------------
    input_shape = (7, 16, 16)                      # (C, H, W)
    x = jax.random.normal(key, (2, *input_shape), dtype=jnp.float32)
    x_cl = jnp.swapaxes(x, 1, -1)                  # reference-only transpose

    pe, input_dim, size = make_positional_encodings(input_shape)
    pe_prep = prepare_pe(pe, x.shape[2:], x.dtype)
    out = jax.block_until_ready(
        positional_encodings_forward(x, pe_prep, input_dim, size))

    ref = jnp.swapaxes(x_cl + pe[:x_cl.shape[1], :x_cl.shape[2]], 1, -1)
    assert out.shape == x.shape and out.dtype == x.dtype
    assert jnp.allclose(out, ref, atol=1e-6), "additive path mismatch"

    # --- concatenation path (size != input_dim), lane-dense HW ---------------
    pe2, input_dim2, size2 = make_positional_encodings(input_shape, size=16)
    pe2_prep = prepare_pe(pe2, x.shape[2:], x.dtype)
    out2 = jax.block_until_ready(
        positional_encodings_forward(x, pe2_prep, input_dim2, size2))

    pos2 = pe2[:x_cl.shape[1], :x_cl.shape[2]]
    ref2 = jnp.swapaxes(
        jnp.concatenate(
            [x_cl, jnp.broadcast_to(pos2, (x.shape[0], *pos2.shape))], -1),
        1, -1)
    assert out2.shape == (x.shape[0], input_dim2 + size2, *x.shape[2:])
    assert jnp.allclose(out2, ref2, atol=1e-6), "concat path mismatch"

    # --- additive path, non-128-aligned (C*H*W = 240 -> padded lane-dense) ---
    input_shape3 = (4, 6, 10)
    x3 = jax.random.normal(jax.random.PRNGKey(1), (2, *input_shape3),
                           dtype=jnp.float32)
    pe3, input_dim3, size3 = make_positional_encodings(input_shape3)
    pe3_prep = prepare_pe(pe3, x3.shape[2:], x3.dtype)
    out3 = jax.block_until_ready(
        positional_encodings_forward(x3, pe3_prep, input_dim3, size3))

    x3_cl = jnp.swapaxes(x3, 1, -1)
    ref3 = jnp.swapaxes(x3_cl + pe3[:x3_cl.shape[1], :x3_cl.shape[2]], 1, -1)
    assert out3.shape == x3.shape
    assert jnp.allclose(out3, ref3, atol=1e-6), "padded additive path mismatch"

    print("KERNEL_OK")
</pallas_src>

<mosaic_0001>
module attributes {stable_mosaic.version = 11 : i64} {
  func.func @_add_kernel(%arg0: i32, %arg1: i32, %arg2: memref<1x8x128xf32, #tpu.memory_space<vmem>>, %arg3: memref<8x128xf32, #tpu.memory_space<vmem>>, %arg4: memref<1x8x128xf32, #tpu.memory_space<vmem>>) attributes {dimension_semantics = [#tpu.dimension_semantics<parallel>, #tpu.dimension_semantics<parallel>], iteration_bounds = array<i64: 2, 2>, scalar_prefetch = 0 : i64, scratch_operands = 0 : i64, tpu.core_type = #tpu.core_type<tc>, window_params = [{transform_indices = @transform_0, window_bounds = array<i64: 1, 8, 128>}, {transform_indices = @transform_1, window_bounds = array<i64: 8, 128>}, {transform_indices = @transform_2, window_bounds = array<i64: 1, 8, 128>}]} {
    %c0 = arith.constant 0 : index
    %c0_0 = arith.constant 0 : index
    %c0_1 = arith.constant 0 : index
    %0 = vector.load %arg2[%c0, %c0_0, %c0_1] : memref<1x8x128xf32, #tpu.memory_space<vmem>>, vector<1x8x128xf32>
    %1 = vector.shape_cast %0 : vector<1x8x128xf32> to vector<8x128xf32>
    %c0_2 = arith.constant 0 : index
    %c0_3 = arith.constant 0 : index
    %2 = vector.load %arg3[%c0_2, %c0_3] : memref<8x128xf32, #tpu.memory_space<vmem>>, vector<8x128xf32>
    %3 = arith.addf %1, %2 : vector<8x128xf32>
    %c0_4 = arith.constant 0 : index
    %c0_5 = arith.constant 0 : index
    %c0_6 = arith.constant 0 : index
    %4 = vector.load %arg4[%c0_4, %c0_5, %c0_6] : memref<1x8x128xf32, #tpu.memory_space<vmem>>, vector<1x8x128xf32>
    %5 = vector.shape_cast %4 : vector<1x8x128xf32> to vector<8x128xf32>
    %6 = vector.shape_cast %3 : vector<8x128xf32> to vector<1x8x128xf32>
    tpu.vector_store %arg4[%c0_4, %c0_5, %c0_6], %6 {strides = array<i32>} : memref<1x8x128xf32, #tpu.memory_space<vmem>>, vector<1x8x128xf32>,
    return
  }
  func.func @transform_0(%arg0: i32, %arg1: i32) -> (i32, i32, i32) {
    %c0_i32 = arith.constant 0 : i32
    %c0_i32_0 = arith.constant 0 : i32
    return %arg1, %arg0, %c0_i32 : i32, i32, i32
  }
  func.func @transform_1(%arg0: i32, %arg1: i32) -> (i32, i32) {
    %c0_i32 = arith.constant 0 : i32
    %c0_i32_0 = arith.constant 0 : i32
    return %arg0, %c0_i32 : i32, i32
  }
  func.func @transform_2(%arg0: i32, %arg1: i32) -> (i32, i32, i32) {
    %c0_i32 = arith.constant 0 : i32
    %c0_i32_0 = arith.constant 0 : i32
    return %arg1, %arg0, %c0_i32 : i32, i32, i32
  }
}

</mosaic_0001>

<llo_original>
// kernel: tpu_custom_call.1
$region0: #{tpu_custom_call.1}
  #allocation0 [shape = 'u32[]', space=smem, size = 0x4, offset = 0x4, fixed_abs, tag = 'smem constant byte address 0x4 - core index']
  #allocation1 [shape = 'u32[144,128]{1,0:T(1,128)}', space=vmem, size = 0x12000, scoped, tag = 'internal scratch']
  %s0 = inlined_call_operand.vmem [shape: f32[2,14,128], index: 0, kind: input, shape index: {}]
  %s1 = inlined_call_operand.vmem [shape: f32[14,128], index: 1, kind: input, shape index: {}]
  %s2 = inlined_call_operand.vmem [shape: f32[2,14,128], index: 2, kind: output, shape index: {}]
  %s3 = sld [smem:[#allocation0]]
  $region41: #{tpu_custom_call.1} parent=0
    _
  %s5 = ssub.s32 1, %s3
  %s6 = scalar_select 0, %s5, %s3
  loop: start=0, step=1, limit=6
  $region2: #{tpu_custom_call.1} parent=0 // loop_pre_header
    _
  $region3: #{tpu_custom_call.1} parent=0 // loop_header
    %s8 = sphi 0, %s12
    %p9 = scmp.ge.s32.totalorder %s8, 6
    %s15 = sphi 0, %s27
    %s16 = sphi 0, %s23
    %s17 = sphi 0, %s15
    %s18 = sphi 0, %s16
    %s19 = sphi 0, %s17
    %s20 = sphi 0, %s18
    %s32 = sphi 0, %s34
    %s35 = sphi 0, %s32
    %s36 = sphi 0, %s35
    %s52 = sphi 0, %s36
    %s58 = sphi 0, %s60
    %s61 = sphi 0, %s58
    %s62 = sphi 0, %s61
    %s78 = sphi 0, %s62
    %s86 = sphi 0, %s88
    %s89 = sphi 0, %s86
    %s90 = sphi 0, %s89
    %s106 = sphi 0, %s90
  $region4: #{tpu_custom_call.1} parent=0 // loop_header_branch
    %11 = sbr.rel (%p9) target = $region8
  $region5: #{tpu_custom_call.1} parent=0 // loop_body
    %s13 = ssub.s32 %s8, 1
    %s14 = ssub.s32 %s8, 2
    %s21 = sadd.s32 1, %s16
    %p22 = scmp.ge.s32.totalorder %s21, 2
    %s23 = scalar_select %p22, 0, %s21
    %s24 = sadd.s32 1, %s15
    %s25 = scalar_select %p22, %s24, %s15
    %p26 = scmp.ge.s32.totalorder %s25, 2
    %s27 = scalar_select %p26, 0, %s25
    %s28 = ssub.s32 %s16, %s23
    %s29 = ssub.s32 %s15, %s27
    %s30 = sor.u32 %s28, %s29
    %p31 = scmp.eq.s32.totalorder %s30, 0
    %s33 = sadd.s32 %s32, 1
    %s34 = scalar_select %p31, %s32, %s33
    %p37 = pneg %p31
    %p38 = scmp.eq.s32.totalorder %s8, 3
    %p39 = por %p37, %p38
    %p40 = scmp.ne.s32.totalorder %s32, %s35
    %p41 = scmp.eq.s32.totalorder %s8, 0
    %p42 = por %p40, %p41
    %p43 = scmp.ne.s32.totalorder %s32, %s35
    %p44 = scmp.eq.s32.totalorder %s13, 3
    %p45 = por %p43, %p44
    %p46 = scmp.ne.s32.totalorder %s35, %s36
    %p47 = scmp.eq.s32.totalorder %s13, 0
    %p48 = por %p46, %p47
    %p49 = scmp.ne.s32.totalorder %s35, %s36
    %p50 = scmp.eq.s32.totalorder %s14, 3
    %p51 = por %p49, %p50
    %p53 = scmp.ne.s32.totalorder %s36, %s52
    %p54 = scmp.eq.s32.totalorder %s14, 0
    %p55 = por %p53, %p54
    %s56 = ssub.s32 %s15, %s27
    %p57 = scmp.eq.s32.totalorder %s56, 0
    %s59 = sadd.s32 %s58, 1
    %s60 = scalar_select %p57, %s58, %s59
    %p63 = pneg %p57
    %p64 = scmp.eq.s32.totalorder %s8, 3
    %p65 = por %p63, %p64
    %p66 = scmp.ne.s32.totalorder %s58, %s61
    %p67 = scmp.eq.s32.totalorder %s8, 0
    %p68 = por %p66, %p67
    %p69 = scmp.ne.s32.totalorder %s58, %s61
    %p70 = scmp.eq.s32.totalorder %s13, 3
    %p71 = por %p69, %p70
    %p72 = scmp.ne.s32.totalorder %s61, %s62
    %p73 = scmp.eq.s32.totalorder %s13, 0
    %p74 = por %p72, %p73
    %p75 = scmp.ne.s32.totalorder %s61, %s62
    %p76 = scmp.eq.s32.totalorder %s14, 3
    %p77 = por %p75, %p76
    %p79 = scmp.ne.s32.totalorder %s62, %s78
    %p80 = scmp.eq.s32.totalorder %s14, 0
    %p81 = por %p79, %p80
    %s82 = ssub.s32 %s16, %s23
    %s83 = ssub.s32 %s15, %s27
    %s84 = sor.u32 %s82, %s83
    %p85 = scmp.eq.s32.totalorder %s84, 0
    %s87 = sadd.s32 %s86, 1
    %s88 = scalar_select %p85, %s86, %s87
    %p91 = pneg %p85
    %p92 = scmp.eq.s32.totalorder %s8, 3
    %p93 = por %p91, %p92
    %p94 = scmp.ne.s32.totalorder %s86, %s89
    %p95 = scmp.eq.s32.totalorder %s8, 0
    %p96 = por %p94, %p95
    %p97 = scmp.ne.s32.totalorder %s86, %s89
    %p98 = scmp.eq.s32.totalorder %s13, 3
    %p99 = por %p97, %p98
    %p100 = scmp.ne.s32.totalorder %s89, %s90
    %p101 = scmp.eq.s32.totalorder %s13, 0
    %p102 = por %p100, %p101
    %p103 = scmp.ne.s32.totalorder %s89, %s90
    %p104 = scmp.eq.s32.totalorder %s14, 3
    %p105 = por %p103, %p104
    %p107 = scmp.ne.s32.totalorder %s90, %s106
    %p108 = scmp.eq.s32.totalorder %s14, 0
    %p109 = por %p107, %p108
    %p110 = scmp.le.s32.totalorder 1, %s8
    %p111 = scmp.lt.s32.totalorder %s8, 5
    %p112 = pnand %p110, %p111
    %p113 = pneg %p112
    // Predicated region
    $region9: #{tpu_custom_call.1} parent=5 // pred_check
      _
    $region10: #{tpu_custom_call.1} parent=5 // pred_check_branch
      %115 = sbr.rel (%p112) target = $region12
    $region11: #{tpu_custom_call.1} parent=5 // pred_region
      %s116 = ssub.s32 %s8, 1
    $region12: #{tpu_custom_call.1} parent=5 // pred_fallthru
      _
    %p117 = scmp.lt.s32.totalorder %s8, 4
    // Predicated region
    $region13: #{tpu_custom_call.1} parent=5 // pred_check
      %p118 = pneg %p117
    $region14: #{tpu_custom_call.1} parent=5 // pred_check_branch
      %120 = sbr.rel (%p118) target = $region16
    $region15: #{tpu_custom_call.1} parent=5 // pred_region
      // Predicated region
      $region17: #{tpu_custom_call.1} parent=15 // pred_check
        %p121 = pneg %p42
      $region18: #{tpu_custom_call.1} parent=15 // pred_check_branch
        %123 = sbr.rel (%p121) target = $region20
      $region19: #{tpu_custom_call.1} parent=15 // pred_region
        %p124 = scmp.lt.s32.totalorder %s16, 1
        %s125 = scalar_select %p124, %s16, 1
        %p126 = scmp.lt.s32.totalorder %s15, 1
        %s127 = scalar_select %p126, %s15, 1
        %s128 = smul.addr %s125, 2
        %s129 = sadd.s32 %s127, %s128
        %s130 = smul.addr %s129, 8
        %s131 = scalar_lea.vmem %s0, %s130
      $region20: #{tpu_custom_call.1} parent=15 // pred_fallthru
        _
      // Predicated region
      $region21: #{tpu_custom_call.1} parent=15 // pred_check
        %p132 = pneg %p68
      $region22: #{tpu_custom_call.1} parent=15 // pred_check_branch
        %134 = sbr.rel (%p132) target = $region24
      $region23: #{tpu_custom_call.1} parent=15 // pred_region
        %p135 = scmp.lt.s32.totalorder %s15, 1
        %s136 = scalar_select %p135, %s15, 1
        %s137 = smul.addr %s136, 8
        %s138 = scalar_lea.vmem %s1, %s137
      $region24: #{tpu_custom_call.1} parent=15 // pred_fallthru
        _
    $region16: #{tpu_custom_call.1} parent=5 // pred_fallthru
      _
    %p139 = scmp.le.s32.totalorder 1, %s8
    %p140 = scmp.lt.s32.totalorder %s8, 5
    %p141 = pnand %p139, %p140
    %p142 = pneg %p141
    // Predicated region
    $region25: #{tpu_custom_call.1} parent=5 // pred_check
      _
    $region26: #{tpu_custom_call.1} parent=5 // pred_check_branch
      %144 = sbr.rel (%p141) target = $region28
    $region27: #{tpu_custom_call.1} parent=5 // pred_region
      %s145 = ssub.s32 %s8, 1
      %p146 = scmp.lt.s32.totalorder %s18, 1
      %s147 = scalar_select %p146, %s18, 1
      %p148 = scmp.lt.s32.totalorder %s17, 1
      %s149 = scalar_select %p148, %s17, 1
      %s150 = smul.addr %s147, 2
      %s151 = sadd.s32 %s149, %s150
      %s152 = smul.addr %s151, 8
      %s153 = scalar_lea.vmem %s0, %s152
      %p154 = pneg %p48
      %p155 = pneg %p45
      %p156 = scmp.lt.s32.totalorder %s17, 1
      %s157 = scalar_select %p156, %s17, 1
      %s158 = smul.addr %s157, 8
      %s159 = scalar_lea.vmem %s1, %s158
      %p160 = pneg %p74
      %p161 = pneg %p71
      %p162 = pneg %p102
      %p163 = pneg %p99
      %p164 = scmp.lt.s32.totalorder %s18, 1
      %s165 = scalar_select %p164, %s18, 1
      %p166 = scmp.lt.s32.totalorder %s17, 1
      %s167 = scalar_select %p166, %s17, 1
      %s168 = smul.addr %s165, 2
      %s169 = sadd.s32 %s167, %s168
      %s170 = smul.addr %s169, 8
      %s171 = scalar_lea.vmem %s2, %s170
      %p172 = scmp.lt.s32.totalorder %s18, 1
      %s173 = scalar_select %p172, %s18, 1
      %p174 = scmp.lt.s32.totalorder %s17, 1
      %s175 = scalar_select %p174, %s17, 1
      %s176 = smul.addr %s173, 2
      %s177 = sadd.s32 %s175, %s176
      %s178 = smul.addr %s177, 8
      %s179 = scalar_lea.vmem %s0, %s178
      %p180 = scmp.lt.s32.totalorder %s17, 1
      %s181 = scalar_select %p180, %s17, 1
      %s182 = smul.addr %s181, 8
      %s183 = scalar_lea.vmem %s1, %s182
      %p184 = scmp.lt.s32.totalorder %s18, 1
      %s185 = scalar_select %p184, %s18, 1
      %p186 = scmp.lt.s32.totalorder %s17, 1
      %s187 = scalar_select %p186, %s17, 1
      %s188 = smul.addr %s185, 2
      %s189 = sadd.s32 %s187, %s188
      %s190 = smul.addr %s189, 8
      %s191 = scalar_lea.vmem %s2, %s190
      %v192 = vld [vmem:[%s179] sm:$0xff]
      %v193 = vld [vmem:[%s183] sm:$0xff]
      %v194 = vadd.f32 %v192, %v193
      %195 = vst [vmem:[%s191] sm:$0xff] %v194
      %p196 = scmp.lt.s32.totalorder %s18, 1
      %s197 = scalar_select %p196, %s18, 1
      %p198 = scmp.lt.s32.totalorder %s17, 1
      %s199 = scalar_select %p198, %s17, 1
      %s200 = smul.addr %s197, 2
      %s201 = sadd.s32 %s199, %s200
      %s202 = smul.addr %s201, 8
      %s203 = scalar_lea.vmem %s2, %s202
      // Predicated region
      $region29: #{tpu_custom_call.1} parent=27 // pred_check
        %p204 = pneg %p99
      $region30: #{tpu_custom_call.1} parent=27 // pred_check_branch
        %206 = sbr.rel (%p204) target = $region32
      $region31: #{tpu_custom_call.1} parent=27 // pred_region
        _
      $region32: #{tpu_custom_call.1} parent=27 // pred_fallthru
        _
    $region28: #{tpu_custom_call.1} parent=5 // pred_fallthru
      _
    %p207 = scmp.le.s32.totalorder 2, %s8
    // Predicated region
    $region33: #{tpu_custom_call.1} parent=5 // pred_check
      %p208 = pneg %p207
    $region34: #{tpu_custom_call.1} parent=5 // pred_check_branch
      %210 = sbr.rel (%p208) target = $region36
    $region35: #{tpu_custom_call.1} parent=5 // pred_region
      %s211 = ssub.s32 %s8, 2
      // Predicated region
      $region37: #{tpu_custom_call.1} parent=35 // pred_check
        %p212 = pneg %p105
      $region38: #{tpu_custom_call.1} parent=35 // pred_check_branch
        %214 = sbr.rel (%p212) target = $region40
      $region39: #{tpu_custom_call.1} parent=35 // pred_region
        %p215 = scmp.lt.s32.totalorder %s20, 1
        %s216 = scalar_select %p215, %s20, 1
        %p217 = scmp.lt.s32.totalorder %s19, 1
        %s218 = scalar_select %p217, %s19, 1
        %s219 = smul.addr %s216, 2
        %s220 = sadd.s32 %s218, %s219
        %s221 = smul.addr %s220, 8
        %s222 = scalar_lea.vmem %s2, %s221
      $region40: #{tpu_custom_call.1} parent=35 // pred_fallthru
        _
    $region36: #{tpu_custom_call.1} parent=5 // pred_fallthru
      _
  $region6: #{tpu_custom_call.1} parent=0 // loop_footer
    %s12 = sadd.s32 1, %s8
  $region7: #{tpu_custom_call.1} parent=0 // loop_footer_branch
    %7 = sbr.rel target = $region3
  $region8: #{tpu_custom_call.1} parent=0 // loop_exit
    _

</llo_original>
